<compile_context>
chip_gen: v7x
topology: tpu7x:2x2x1
jax: 0.10.0
libtpu: 0.0.40
codegen_flags: <defaults>
</compile_context>

<pallas_src>
import jax
import jax.numpy as jnp
from jax.experimental import pallas as pl
from jax.experimental.pallas import tpu as pltpu

NUM_MODELS = 4
NUM_CLASSES = 5
INPUT_SIZE = (3, 2, 2)   # (C, H, W) per model, as in the module defaults
BATCH = 2
LANES = 128              # lane-dense padded width for all vector tiles


def ensemble_kernel(coef_ref, lmc_ref, bias_ref, noise_ref, agg_ref):
    """Reduce-first ensemble math on lane-padded tiles.

    coef_ref  : SMEM (2,)   f32 -> [scale/N, 0.1*scale/N]
    lmc_ref   : VMEM (N,128) i32 -> label - class_id (one-hot == compare-to-zero),
                                    padding lanes hold a nonzero sentinel
    bias_ref  : VMEM (1,128) f32 -> pre-fused scale*bias + scale*common_bias
    noise_ref : VMEM (N,128) f32 -> raw N(0,1) noise (wrapper-generated)
    agg_ref   : VMEM (1,128) f32 -> aggregated logits (flat, lane-padded) output
    """
    scale_over_n = coef_ref[0]       # scale / N
    noise_coeff = coef_ref[1]        # 0.1 * scale / N

    # One-hot via compare-to-zero of the pre-fused (label - class_id) tile.
    onehot = (lmc_ref[...] == 0).astype(jnp.float32)          # (N, 128)

    # Reduce over the model axis first (XLU sublane reduce), then apply the
    # affine terms once on a single (1, 128) row.
    oh_sum = jnp.sum(onehot, axis=0, keepdims=True)           # (1, 128)
    nz_sum = jnp.sum(noise_ref[...], axis=0, keepdims=True)   # (1, 128)

    agg_ref[...] = scale_over_n * oh_sum + bias_ref[...] + noise_coeff * nz_sum


def dotnet_ensemble_forward(x, scale, bias, common_bias_std, key):
    """Label extraction, RNG draws, constant folding in the wrapper; reduce in kernel."""
    n, b, _c, _h, _w = x.shape
    num_classes = NUM_CLASSES
    bc = b * num_classes
    assert bc <= LANES, "B*C > 128: add a grid over the lane axis (parallel for v7x)"
    assert n >= 1

    # labels[n, j // C] - (j % C), flattened so the class axis is lane-dense.
    # (At large NUM_CLASSES, pass labels and build the one-hot in-kernel with
    #  broadcasted_iota instead to cut HBM traffic by a factor of C.)
    labels = x[:, :, 0, 0, 0].astype(jnp.int32)                            # (N, B)
    class_ids = jnp.arange(num_classes, dtype=jnp.int32)                   # (C,)
    lmc = (labels[:, :, None] - class_ids[None, None, :]).reshape(n, bc)   # (N, B*C)
    lmc = jnp.pad(lmc, ((0, 0), (0, LANES - bc)), constant_values=1)       # sentinel != 0

    k_cb, k_noise = jax.random.split(key)
    common_bias = jax.random.normal(k_cb, (b,), dtype=jnp.float32) * jnp.abs(common_bias_std)
    noise = jax.random.normal(k_noise, (n, b, num_classes), dtype=jnp.float32)

    scale_f = jnp.asarray(scale, jnp.float32)
    bias_f = jnp.asarray(bias, jnp.float32)
    inv_n = jnp.float32(1.0 / n)

    # Pre-fused bias row: scale*bias + scale*common_bias, repeated per class.
    fused_bias = scale_f * (bias_f + jnp.repeat(common_bias, num_classes))  # (B*C,)
    fused_bias = jnp.pad(fused_bias, (0, LANES - bc)).reshape(1, LANES)

    noise_flat = jnp.pad(noise.reshape(n, bc), ((0, 0), (0, LANES - bc)))   # (N, 128)

    coef = jnp.stack([scale_f * inv_n, jnp.float32(0.1) * scale_f * inv_n])

    agg_padded = pl.pallas_call(
        ensemble_kernel,
        out_shape=jax.ShapeDtypeStruct((1, LANES), jnp.float32),
        in_specs=[
            pl.BlockSpec(memory_space=pltpu.MemorySpace.SMEM),   # coef (2,)
            pl.BlockSpec((n, LANES), lambda: (0, 0)),            # label - class_id
            pl.BlockSpec((1, LANES), lambda: (0, 0)),            # fused bias row
            pl.BlockSpec((n, LANES), lambda: (0, 0)),            # noise
        ],
        out_specs=pl.BlockSpec((1, LANES), lambda: (0, 0)),
    )(coef, lmc, fused_bias, noise_flat)

    agg = agg_padded[0, :bc].reshape(b, num_classes)
    return agg, noise, common_bias


def reference_forward(x, scale, bias, noise, common_bias):
    """Pure-JAX reference mirroring the PyTorch forward (original op order)."""
    labels = x[:, :, 0, 0, 0].astype(jnp.int32)
    onehot = jax.nn.one_hot(labels, NUM_CLASSES, dtype=jnp.float32)
    features = onehot + bias + 0.1 * noise + common_bias[None, :, None]
    logits = features * scale
    return logits.mean(axis=0)


if __name__ == "__main__":
    key = jax.random.PRNGKey(0)
    k_labels, k_rng = jax.random.split(key)

    # Deterministic parameters (module inits all three to 1.0)
    scale = jnp.float32(1.0)
    bias = jnp.float32(1.0)
    common_bias_std = jnp.float32(1.0)

    # Build x = (num_models, batch, C, H, W) whose [:, :, 0, 0, 0] entries are
    # valid class labels in [0, NUM_CLASSES).
    labels = jax.random.randint(k_labels, (NUM_MODELS, BATCH), 0, NUM_CLASSES)
    x = jnp.broadcast_to(
        labels.astype(jnp.float32)[:, :, None, None, None],
        (NUM_MODELS, BATCH) + INPUT_SIZE,
    )

    agg, noise, common_bias = dotnet_ensemble_forward(x, scale, bias, common_bias_std, k_rng)
    agg = jax.block_until_ready(agg)

    # Verify the reduce-first kernel against the original-order reference, using
    # the wrapper's noise draw and common bias (same random variables both paths).
    ref = reference_forward(x, scale, bias, noise, common_bias)
    assert agg.shape == (BATCH, NUM_CLASSES)
    assert jnp.allclose(agg, ref, atol=1e-5, rtol=1e-5), (agg, ref)

    print("KERNEL_OK")
</pallas_src>

<mosaic_0001>
module attributes {stable_mosaic.version = 11 : i64} {
  func.func @ensemble_kernel(%arg0: memref<2xf32, #tpu.memory_space<smem>>, %arg1: memref<4x128xi32, #tpu.memory_space<vmem>>, %arg2: memref<1x128xf32, #tpu.memory_space<vmem>>, %arg3: memref<4x128xf32, #tpu.memory_space<vmem>>, %arg4: memref<1x128xf32, #tpu.memory_space<vmem>>) attributes {dimension_semantics = [], scalar_prefetch = 0 : i64, scratch_operands = 0 : i64, tpu.core_type = #tpu.core_type<tc>} {
    %c0 = arith.constant 0 : index
    %0 = memref.load %arg0[%c0] : memref<2xf32, #tpu.memory_space<smem>>
    %c1 = arith.constant 1 : index
    %1 = memref.load %arg0[%c1] : memref<2xf32, #tpu.memory_space<smem>>
    %c0_0 = arith.constant 0 : index
    %c0_1 = arith.constant 0 : index
    %2 = vector.load %arg1[%c0_0, %c0_1] : memref<4x128xi32, #tpu.memory_space<vmem>>, vector<4x128xi32>
    %c0_i32 = arith.constant 0 : i32
    %3 = vector.broadcast %c0_i32 : i32 to vector<4x128xi32>
    %4 = arith.cmpi eq, %2, %3 : vector<4x128xi32>
    %5 = arith.extui %4 : vector<4x128xi1> to vector<4x128xi32>
    %6 = arith.sitofp %5 : vector<4x128xi32> to vector<4x128xf32>
    %cst = arith.constant dense<0.000000e+00> : vector<128xf32>
    %7 = vector.multi_reduction <add>, %6, %cst [0] : vector<4x128xf32> to vector<128xf32>
    %8 = vector.shape_cast %7 : vector<128xf32> to vector<1x128xf32>
    %c0_2 = arith.constant 0 : index
    %c0_3 = arith.constant 0 : index
    %9 = vector.load %arg3[%c0_2, %c0_3] : memref<4x128xf32, #tpu.memory_space<vmem>>, vector<4x128xf32>
    %cst_4 = arith.constant dense<0.000000e+00> : vector<128xf32>
    %10 = vector.multi_reduction <add>, %9, %cst_4 [0] : vector<4x128xf32> to vector<128xf32>
    %11 = vector.shape_cast %10 : vector<128xf32> to vector<1x128xf32>
    %12 = vector.broadcast %0 : f32 to vector<1x128xf32>
    %13 = arith.mulf %12, %8 : vector<1x128xf32>
    %c0_5 = arith.constant 0 : index
    %c0_6 = arith.constant 0 : index
    %14 = vector.load %arg2[%c0_5, %c0_6] : memref<1x128xf32, #tpu.memory_space<vmem>>, vector<1x128xf32>
    %15 = arith.addf %13, %14 : vector<1x128xf32>
    %16 = vector.broadcast %1 : f32 to vector<1x128xf32>
    %17 = arith.mulf %16, %11 : vector<1x128xf32>
    %18 = arith.addf %15, %17 : vector<1x128xf32>
    %c0_7 = arith.constant 0 : index
    %c0_8 = arith.constant 0 : index
    %19 = vector.load %arg4[%c0_7, %c0_8] : memref<1x128xf32, #tpu.memory_space<vmem>>, vector<1x128xf32>
    tpu.vector_store %arg4[%c0_7, %c0_8], %18 {strides = array<i32>} : memref<1x128xf32, #tpu.memory_space<vmem>>, vector<1x128xf32>,
    return
  }
}

</mosaic_0001>

<llo_original>
// kernel: tpu_custom_call.1
$region0: #{tpu_custom_call.1}
  #allocation0 [shape = 'u32[]', space=smem, size = 0x4, offset = 0x4, fixed_abs, tag = 'smem constant byte address 0x4 - core index']
  #allocation1 [shape = 'u32[144,128]{1,0:T(1,128)}', space=vmem, size = 0x12000, scoped, tag = 'internal scratch']
  %s0 = inlined_call_operand.hbm [shape: f32[2], index: 0, kind: input, shape index: {}]
  %s1 = inlined_call_operand.hbm [shape: s32[4,128], index: 1, kind: input, shape index: {}]
  %s2 = inlined_call_operand.vmem [shape: f32[1,128], index: 2, kind: input, shape index: {}]
  %s3 = inlined_call_operand.vmem [shape: f32[4,128], index: 3, kind: input, shape index: {}]
  %s4 = inlined_call_operand.hbm [shape: f32[1,128], index: 4, kind: output, shape index: {}]
  %s5 = sld [smem:[#allocation0]]
  $region34: #{tpu_custom_call.1} parent=0
    _
  %s7 = ssub.s32 1, %s5
  %s8 = scalar_select 0, %s7, %s5
  $region1: #{tpu_custom_call.1} parent=0
    #allocation2 [shape = 'u8[512]{0}', space=smem, size = 0x200, scoped, tag = 'input window, operand 0, single buffered']
    #allocation3 [shape = 's32[1]{0}', space=sflag, size = 0x4, scoped, tag = 'scoped memory for tpu_custom_call.1']
    #allocation4 [shape = 's32[1]{0}', space=sflag, size = 0x4, scoped, tag = 'scoped memory for tpu_custom_call.1']
    #allocation5 [shape = 's32[1]{0}', space=sflag, size = 0x4, scoped, tag = 'scoped memory for tpu_custom_call.1']
    #allocation6 [shape = 'u8[2048]{0}', space=vmem, size = 0x800, scoped, tag = 'input window, operand 1, single buffered']
    #allocation7 [shape = 'u8[512]{0}', space=vmem, size = 0x400, scoped, tag = 'output window, operand 0, single buffered']
    %9 = vsyncpa [#allocation5], 0
    %10 = vsyncpa [#allocation3], 0
    %11 = vsyncpa [#allocation4], 0
    // Predicated region
    $region2: #{tpu_custom_call.1} parent=1 // pred_check
      _
    $region3: #{tpu_custom_call.1} parent=1 // pred_check_branch
      %13 = sbr.rel (0) target = $region5
    $region4: #{tpu_custom_call.1} parent=1 // pred_region
      %s15 = ssub.s32 16, 16
      %16 = vsyncadd [#allocation5], %s15
      %19 = dma.hbm_to_smem %s0, 16, [#allocation2], [#allocation5]
    $region5: #{tpu_custom_call.1} parent=1 // pred_fallthru
      _
    // Predicated region
    $region6: #{tpu_custom_call.1} parent=1 // pred_check
      _
    $region7: #{tpu_custom_call.1} parent=1 // pred_check_branch
      %21 = sbr.rel (0) target = $region9
    $region8: #{tpu_custom_call.1} parent=1 // pred_region
      %s23 = ssub.s32 64, 64
      %24 = vsyncadd [#allocation3], %s23
      %s26 = sshll.u32 [#allocation6], 4
      %s27 = int_to_ptr.vmem [resolvable:$true] %s26
      %29 = dma.hbm_to_vmem [thread:$0]  %s1, 64, %s27, [#allocation3]
    $region9: #{tpu_custom_call.1} parent=1 // pred_fallthru
      _
    // Predicated region
    $region10: #{tpu_custom_call.1} parent=1 // pred_check
      _
    $region11: #{tpu_custom_call.1} parent=1 // pred_check_branch
      %31 = sbr.rel (0) target = $region13
    $region12: #{tpu_custom_call.1} parent=1 // pred_region
      _
    $region13: #{tpu_custom_call.1} parent=1 // pred_fallthru
      _
    // Predicated region
    $region14: #{tpu_custom_call.1} parent=1 // pred_check
      _
    $region15: #{tpu_custom_call.1} parent=1 // pred_check_branch
      %33 = sbr.rel (0) target = $region17
    $region16: #{tpu_custom_call.1} parent=1 // pred_region
      _
    $region17: #{tpu_custom_call.1} parent=1 // pred_fallthru
      _
    // Predicated region
    $region18: #{tpu_custom_call.1} parent=1 // pred_check
      _
    $region19: #{tpu_custom_call.1} parent=1 // pred_check_branch
      %35 = sbr.rel (0) target = $region21
    $region20: #{tpu_custom_call.1} parent=1 // pred_region
      %36 = dma.done [#allocation5], 16
    $region21: #{tpu_custom_call.1} parent=1 // pred_fallthru
      _
    // Predicated region
    $region22: #{tpu_custom_call.1} parent=1 // pred_check
      _
    $region23: #{tpu_custom_call.1} parent=1 // pred_check_branch
      %38 = sbr.rel (0) target = $region25
    $region24: #{tpu_custom_call.1} parent=1 // pred_region
      %39 = dma.done [#allocation3], 64
    $region25: #{tpu_custom_call.1} parent=1 // pred_fallthru
      _
    %40 = sfence
    %s41 = sld [smem:[#allocation2]]
    %s42 = sld [smem:[#allocation2 + $0x1]]
    %v43 = vld [vmem:[#allocation6] sm:$0xf]
    %vm44 = vcmp.eq.s32.totalorder %v43, 0
    %v45 = vsel %vm44, 1, 0
    %v46 = vcvt.s32.f32 %v45
    %vm47 = vcmask 1043456
    %v48 = vsel %vm47, %v46, 0.0
    %v49 = vrot.slane %v48, 4
    %v50 = vadd.f32 %v48, %v49
    %v51 = vrot.slane %v50, 2
    %v52 = vadd.f32 %v50, %v51
    %v53 = vrot.slane %v52, 1
    %v54 = vadd.f32 %v52, %v53
    %v55 = vld [vmem:[%s3] sm:$0xf]
    %v56 = vsel %vm47, %v55, 0.0
    %v57 = vrot.slane %v56, 4
    %v58 = vadd.f32 %v56, %v57
    %v59 = vrot.slane %v58, 2
    %v60 = vadd.f32 %v58, %v59
    %v61 = vrot.slane %v60, 1
    %v62 = vadd.f32 %v60, %v61
    %v63 = vstv %s41
    %v64 = vmul.f32 %v63, %v54
    %v65 = vld [vmem:[%s2] sm:$0x1]
    %v66 = vadd.f32 %v64, %v65
    %v67 = vstv %s42
    %v68 = vmul.f32 %v67, %v62
    %v69 = vadd.f32 %v66, %v68
    %70 = vst [vmem:[#allocation7] sm:$0x1] %v69
    // Predicated region
    $region26: #{tpu_custom_call.1} parent=1 // pred_check
      _
    $region27: #{tpu_custom_call.1} parent=1 // pred_check_branch
      %72 = sbr.rel (0) target = $region29
    $region28: #{tpu_custom_call.1} parent=1 // pred_region
      %s74 = ssub.s32 16, 16
      %75 = vsyncadd [#allocation4], %s74
      %s77 = sshll.u32 [#allocation7], 4
      %s78 = int_to_ptr.vmem [resolvable:$true] %s77
      %80 = dma.vmem_to_hbm [thread:$0]  %s78, 16, %s4, [#allocation4]
    $region29: #{tpu_custom_call.1} parent=1 // pred_fallthru
      _
    // Predicated region
    $region30: #{tpu_custom_call.1} parent=1 // pred_check
      _
    $region31: #{tpu_custom_call.1} parent=1 // pred_check_branch
      %82 = sbr.rel (0) target = $region33
    $region32: #{tpu_custom_call.1} parent=1 // pred_region
      %83 = dma.done [#allocation4], 16
    $region33: #{tpu_custom_call.1} parent=1 // pred_fallthru
      _
    %84 = vsyncpa [#allocation3], 1
    %85 = vsyncpa [#allocation4], 1
    %86 = vsyncpa [#allocation5], 1

</llo_original>
